<compile_context>
chip_gen: v6e
topology: v6e:2x2x1
jax: 0.10.0
libtpu: 0.0.40
codegen_flags: <defaults>
</compile_context>

<pallas_src>
import jax
import jax.numpy as jnp
from jax.experimental import pallas as pl
from jax.experimental.pallas import tpu as pltpu

LANE = 128      # lane width: every feature dim is zero-padded to this
NOISE = 64      # eps width in ToyEncoder (torch.randn((B, 64)))


def _round_up(n, m):
    return ((n + m - 1) // m) * m


def _mlp_kernel(xin_ref,
                w1_ref, b1_ref,
                w2_ref, b2_ref,
                w3_ref, b3_ref,
                w4_ref, b4_ref,
                w5_ref, b5_ref,
                o_ref):
    """Fused 5-layer MLP: Linear -> LeakyReLU(0.2) x4 -> Linear.

    xin_ref already holds concat([x, eps]) in lanes [0:size+64) (bf16).
    Matmul inputs are bf16, accumulation / bias / LeakyReLU in f32, carried
    activations are cast back to bf16.  Padded lanes carry exact zeros all the
    way through (zero weights, zero bias, LeakyReLU(0) == 0), so padding never
    perturbs the valid lanes.
    """

    def lrelu_bf16(h_f32):
        return jnp.where(h_f32 > 0, h_f32, 0.2 * h_f32).astype(jnp.bfloat16)

    def linear(h_bf16, w_ref, b_ref):
        return jnp.dot(h_bf16, w_ref[...],
                       preferred_element_type=jnp.float32) + b_ref[...]

    h = lrelu_bf16(linear(xin_ref[...], w1_ref, b1_ref))
    h = lrelu_bf16(linear(h, w2_ref, b2_ref))
    h = lrelu_bf16(linear(h, w3_ref, b3_ref))
    h = lrelu_bf16(linear(h, w4_ref, b4_ref))
    h = linear(h, w5_ref, b5_ref)          # final Linear(64, n_z), no activation
    o_ref[...] = h.astype(o_ref.dtype)     # bf16 lane-dense writeback


def init_params(key, size, n_z):
    """torch.nn.Linear-style init (uniform +-1/sqrt(fan_in)); weights stored (in, out)."""
    dims = [size + NOISE, 64, 64, 64, 64, n_z]
    params = []
    for i in range(5):
        fan_in, fan_out = dims[i], dims[i + 1]
        key, kw, kb = jax.random.split(key, 3)
        bound = 1.0 / jnp.sqrt(float(fan_in))
        w_t = jax.random.uniform(kw, (fan_in, fan_out), jnp.float32, -bound, bound)
        b = jax.random.uniform(kb, (1, fan_out), jnp.float32, -bound, bound)
        params.append((w_t, b))
    return params


def prep_params(params):
    """Pad the (in, out) params into kernel layout.

    Returns [w1, b1, w2, b2, w3, b3, w4, b4, w5, b5]:
      weights -> bf16, zero-padded to (128, 128)  (W1 kept whole: rows 0..size-1
                 multiply x lanes, rows size..size+63 multiply eps lanes)
      biases  -> f32,  zero-padded to (1, 128)
    """
    def pad_w(w):
        kin, kout = w.shape
        wp = jnp.zeros((LANE, LANE), jnp.float32).at[:kin, :kout].set(w)
        return wp.astype(jnp.bfloat16)

    def pad_b(b):
        b = jnp.asarray(b).reshape(1, -1)
        return jnp.zeros((1, LANE), jnp.float32).at[:, :b.shape[1]].set(b)

    out = []
    for w, b in params:
        out.append(pad_w(w))
        out.append(pad_b(b))
    return out


def toy_encoder_forward(x, eps, kernel_params, n_z, *, tile_b=2048):
    """x: (B, ...) flattened to (B, size); eps: (B, 64) is the module's torch.randn noise."""
    batch = x.shape[0]
    x_flat = x.reshape(batch, -1).astype(jnp.float32)
    size = x_flat.shape[1]

    # Layer-1 fan-in (and n_z) must fit inside one 128-lane vreg row.
    assert size + NOISE <= LANE, f"size + 64 = {size + NOISE} must be <= {LANE}"
    assert eps.shape == (batch, NOISE), eps.shape
    assert n_z <= LANE

    # Batch tile: multiple of 16 sublane-pairs (bf16 packs 2 rows per sublane),
    # capped at tile_b; batch padded to a multiple of the tile.
    tile_b = _round_up(tile_b, 16)
    tb = min(tile_b, _round_up(batch, 16))
    padded_b = _round_up(batch, tb)
    # v7x has 2 TensorCores: make sure the "parallel" grid has >= 2 steps when
    # the batch is big enough to split, otherwise one core sits idle.
    if padded_b // tb < 2 and padded_b >= 32:
        tb = _round_up(padded_b // 2, 16)
        padded_b = _round_up(batch, tb)
    grid = (padded_b // tb,)

    # Single fused, lane-dense, bf16 input slab: x in lanes [0:size),
    # eps in lanes [size:size+64), zeros elsewhere (incl. padded batch rows).
    xin = jnp.zeros((padded_b, LANE), jnp.bfloat16)
    xin = xin.at[:batch, :size].set(x_flat.astype(jnp.bfloat16))
    xin = xin.at[:batch, size:size + NOISE].set(eps.astype(jnp.bfloat16))

    act_spec = pl.BlockSpec((tb, LANE), lambda i: (i, 0))
    w_spec = pl.BlockSpec((LANE, LANE), lambda i: (0, 0))   # VMEM-resident
    b_spec = pl.BlockSpec((1, LANE), lambda i: (0, 0))      # VMEM-resident

    in_specs = [act_spec] + [w_spec, b_spec] * 5

    # 5 padded 128x128 MXU passes per row; bf16 in / bf16 out.
    flops = 2 * padded_b * LANE * LANE * 5
    bytes_accessed = (padded_b * LANE * 2                     # fused bf16 input
                      + 5 * LANE * LANE * 2 + 5 * LANE * 4    # weights + biases
                      + padded_b * LANE * 2)                  # bf16 output

    # Per-step VMEM (tb=2048): 512 KiB in + 512 KiB out, x2 double-buffering,
    # + ~165 KiB resident weights  ~= 2.2 MiB -> well inside the 32 MiB scoped
    # limit on every generation (v7x physical VMEM is 64 MiB per core).
    out = pl.pallas_call(
        _mlp_kernel,
        out_shape=jax.ShapeDtypeStruct((padded_b, LANE), jnp.bfloat16),
        grid=grid,
        in_specs=in_specs,
        out_specs=pl.BlockSpec((tb, LANE), lambda i: (i, 0)),
        compiler_params=pltpu.CompilerParams(
            dimension_semantics=("parallel",),
            vmem_limit_bytes=32 * 1024 * 1024),
        cost_estimate=pl.CostEstimate(flops=flops, transcendentals=0,
                                      bytes_accessed=bytes_accessed),
    )(xin, *kernel_params)

    # Slice out the valid (batch, n_z) latent and upcast for interface parity
    # with the f32 PyTorch module (bf16 -> f32 is exact).
    return out[:batch, :n_z].astype(jnp.float32)


def reference_forward(x, eps, kernel_params, n_z):
    """Plain-JAX reference mirroring the kernel math exactly
    (fused bf16 input, bf16 carried activations, f32 accumulation, bf16 out)."""
    batch = x.shape[0]
    x_flat = x.reshape(batch, -1).astype(jnp.float32)
    size = x_flat.shape[1]

    xin = jnp.zeros((batch, LANE), jnp.bfloat16)
    xin = xin.at[:, :size].set(x_flat.astype(jnp.bfloat16))
    xin = xin.at[:, size:size + NOISE].set(eps.astype(jnp.bfloat16))

    (w1, b1, w2, b2, w3, b3, w4, b4, w5, b5) = kernel_params

    def lrelu_bf16(h):
        return jnp.where(h > 0, h, 0.2 * h).astype(jnp.bfloat16)

    h = lrelu_bf16(jnp.dot(xin, w1, preferred_element_type=jnp.float32) + b1)
    for w, b in ((w2, b2), (w3, b3), (w4, b4)):
        h = lrelu_bf16(jnp.dot(h, w, preferred_element_type=jnp.float32) + b)
    h = jnp.dot(h, w5, preferred_element_type=jnp.float32) + b5
    return h.astype(jnp.bfloat16)[:, :n_z].astype(jnp.float32)


if __name__ == "__main__":
    size = 16     # flattened toy-data size
    n_z = 8       # latent dim
    batch = 8

    key = jax.random.PRNGKey(0)
    k_x, k_eps, k_p = jax.random.split(key, 3)

    x = jax.random.normal(k_x, (batch, size), jnp.float32)
    # eps plays the role of torch.randn((batch, 64)) generated inside forward().
    eps = jax.random.normal(k_eps, (batch, NOISE), jnp.float32)

    params = init_params(k_p, size, n_z)
    kernel_params = prep_params(params)

    out = toy_encoder_forward(x, eps, kernel_params, n_z)
    out = jax.block_until_ready(out)

    ref = reference_forward(x, eps, kernel_params, n_z)
    assert out.shape == (batch, n_z), out.shape
    assert jnp.allclose(out, ref, atol=2e-2, rtol=2e-2), (
        float(jnp.max(jnp.abs(out - ref))))

    print("KERNEL_OK")
</pallas_src>

<mosaic_0001>
module attributes {stable_mosaic.version = 11 : i64} {
  func.func @_mlp_kernel(%arg0: i32, %arg1: memref<16x128xbf16, #tpu.memory_space<vmem>>, %arg2: memref<128x128xbf16, #tpu.memory_space<vmem>>, %arg3: memref<1x128xf32, #tpu.memory_space<vmem>>, %arg4: memref<128x128xbf16, #tpu.memory_space<vmem>>, %arg5: memref<1x128xf32, #tpu.memory_space<vmem>>, %arg6: memref<128x128xbf16, #tpu.memory_space<vmem>>, %arg7: memref<1x128xf32, #tpu.memory_space<vmem>>, %arg8: memref<128x128xbf16, #tpu.memory_space<vmem>>, %arg9: memref<1x128xf32, #tpu.memory_space<vmem>>, %arg10: memref<128x128xbf16, #tpu.memory_space<vmem>>, %arg11: memref<1x128xf32, #tpu.memory_space<vmem>>, %arg12: memref<16x128xbf16, #tpu.memory_space<vmem>>) attributes {dimension_semantics = [#tpu.dimension_semantics<parallel>], iteration_bounds = array<i64: 1>, scalar_prefetch = 0 : i64, scratch_operands = 0 : i64, tpu.core_type = #tpu.core_type<tc>, window_params = [{transform_indices = @transform_0, window_bounds = array<i64: 16, 128>}, {pipeline_mode = #tpu.pipeline_mode<synchronous>, transform_indices = @transform_1, window_bounds = array<i64: 128, 128>}, {pipeline_mode = #tpu.pipeline_mode<synchronous>, transform_indices = @transform_2, window_bounds = array<i64: 1, 128>}, {pipeline_mode = #tpu.pipeline_mode<synchronous>, transform_indices = @transform_3, window_bounds = array<i64: 128, 128>}, {pipeline_mode = #tpu.pipeline_mode<synchronous>, transform_indices = @transform_4, window_bounds = array<i64: 1, 128>}, {pipeline_mode = #tpu.pipeline_mode<synchronous>, transform_indices = @transform_5, window_bounds = array<i64: 128, 128>}, {pipeline_mode = #tpu.pipeline_mode<synchronous>, transform_indices = @transform_6, window_bounds = array<i64: 1, 128>}, {pipeline_mode = #tpu.pipeline_mode<synchronous>, transform_indices = @transform_7, window_bounds = array<i64: 128, 128>}, {pipeline_mode = #tpu.pipeline_mode<synchronous>, transform_indices = @transform_8, window_bounds = array<i64: 1, 128>}, {pipeline_mode = #tpu.pipeline_mode<synchronous>, transform_indices = @transform_9, window_bounds = array<i64: 128, 128>}, {pipeline_mode = #tpu.pipeline_mode<synchronous>, transform_indices = @transform_10, window_bounds = array<i64: 1, 128>}, {transform_indices = @transform_11, window_bounds = array<i64: 16, 128>}]} {
    %c0 = arith.constant 0 : index
    %c0_0 = arith.constant 0 : index
    %0 = vector.load %arg1[%c0, %c0_0] : memref<16x128xbf16, #tpu.memory_space<vmem>>, vector<16x128xbf16>
    %c0_1 = arith.constant 0 : index
    %c0_2 = arith.constant 0 : index
    %1 = vector.load %arg2[%c0_1, %c0_2] : memref<128x128xbf16, #tpu.memory_space<vmem>>, vector<128x128xbf16>
    %cst = arith.constant dense<0.000000e+00> : vector<16x128xf32>
    %2 = tpu.matmul %0, %1, %cst {dimension_numbers = #tpu.dot_dimension_numbers<[1], [0], [0], [1], [0, 0, 1, 1], [], []>} : vector<16x128xbf16>, vector<128x128xbf16>, vector<16x128xf32> -> vector<16x128xf32>
    %c0_3 = arith.constant 0 : index
    %c0_4 = arith.constant 0 : index
    %3 = vector.load %arg3[%c0_3, %c0_4] : memref<1x128xf32, #tpu.memory_space<vmem>>, vector<1x128xf32>
    %4 = vector.broadcast %3 : vector<1x128xf32> to vector<16x128xf32>
    %5 = arith.addf %2, %4 : vector<16x128xf32>
    %cst_5 = arith.constant 0.000000e+00 : f32
    %6 = vector.broadcast %cst_5 : f32 to vector<16x128xf32>
    %7 = arith.cmpf ogt, %5, %6 : vector<16x128xf32>
    %cst_6 = arith.constant 2.000000e-01 : f32
    %8 = vector.broadcast %cst_6 : f32 to vector<16x128xf32>
    %9 = arith.mulf %8, %5 : vector<16x128xf32>
    %10 = arith.select %7, %5, %9 : vector<16x128xi1>, vector<16x128xf32>
    %11 = arith.truncf %10 : vector<16x128xf32> to vector<16x128xbf16>
    %c0_7 = arith.constant 0 : index
    %c0_8 = arith.constant 0 : index
    %12 = vector.load %arg4[%c0_7, %c0_8] : memref<128x128xbf16, #tpu.memory_space<vmem>>, vector<128x128xbf16>
    %cst_9 = arith.constant dense<0.000000e+00> : vector<16x128xf32>
    %13 = tpu.matmul %11, %12, %cst_9 {dimension_numbers = #tpu.dot_dimension_numbers<[1], [0], [0], [1], [0, 0, 1, 1], [], []>} : vector<16x128xbf16>, vector<128x128xbf16>, vector<16x128xf32> -> vector<16x128xf32>
    %c0_10 = arith.constant 0 : index
    %c0_11 = arith.constant 0 : index
    %14 = vector.load %arg5[%c0_10, %c0_11] : memref<1x128xf32, #tpu.memory_space<vmem>>, vector<1x128xf32>
    %15 = vector.broadcast %14 : vector<1x128xf32> to vector<16x128xf32>
    %16 = arith.addf %13, %15 : vector<16x128xf32>
    %cst_12 = arith.constant 0.000000e+00 : f32
    %17 = vector.broadcast %cst_12 : f32 to vector<16x128xf32>
    %18 = arith.cmpf ogt, %16, %17 : vector<16x128xf32>
    %cst_13 = arith.constant 2.000000e-01 : f32
    %19 = vector.broadcast %cst_13 : f32 to vector<16x128xf32>
    %20 = arith.mulf %19, %16 : vector<16x128xf32>
    %21 = arith.select %18, %16, %20 : vector<16x128xi1>, vector<16x128xf32>
    %22 = arith.truncf %21 : vector<16x128xf32> to vector<16x128xbf16>
    %c0_14 = arith.constant 0 : index
    %c0_15 = arith.constant 0 : index
    %23 = vector.load %arg6[%c0_14, %c0_15] : memref<128x128xbf16, #tpu.memory_space<vmem>>, vector<128x128xbf16>
    %cst_16 = arith.constant dense<0.000000e+00> : vector<16x128xf32>
    %24 = tpu.matmul %22, %23, %cst_16 {dimension_numbers = #tpu.dot_dimension_numbers<[1], [0], [0], [1], [0, 0, 1, 1], [], []>} : vector<16x128xbf16>, vector<128x128xbf16>, vector<16x128xf32> -> vector<16x128xf32>
    %c0_17 = arith.constant 0 : index
    %c0_18 = arith.constant 0 : index
    %25 = vector.load %arg7[%c0_17, %c0_18] : memref<1x128xf32, #tpu.memory_space<vmem>>, vector<1x128xf32>
    %26 = vector.broadcast %25 : vector<1x128xf32> to vector<16x128xf32>
    %27 = arith.addf %24, %26 : vector<16x128xf32>
    %cst_19 = arith.constant 0.000000e+00 : f32
    %28 = vector.broadcast %cst_19 : f32 to vector<16x128xf32>
    %29 = arith.cmpf ogt, %27, %28 : vector<16x128xf32>
    %cst_20 = arith.constant 2.000000e-01 : f32
    %30 = vector.broadcast %cst_20 : f32 to vector<16x128xf32>
    %31 = arith.mulf %30, %27 : vector<16x128xf32>
    %32 = arith.select %29, %27, %31 : vector<16x128xi1>, vector<16x128xf32>
    %33 = arith.truncf %32 : vector<16x128xf32> to vector<16x128xbf16>
    %c0_21 = arith.constant 0 : index
    %c0_22 = arith.constant 0 : index
    %34 = vector.load %arg8[%c0_21, %c0_22] : memref<128x128xbf16, #tpu.memory_space<vmem>>, vector<128x128xbf16>
    %cst_23 = arith.constant dense<0.000000e+00> : vector<16x128xf32>
    %35 = tpu.matmul %33, %34, %cst_23 {dimension_numbers = #tpu.dot_dimension_numbers<[1], [0], [0], [1], [0, 0, 1, 1], [], []>} : vector<16x128xbf16>, vector<128x128xbf16>, vector<16x128xf32> -> vector<16x128xf32>
    %c0_24 = arith.constant 0 : index
    %c0_25 = arith.constant 0 : index
    %36 = vector.load %arg9[%c0_24, %c0_25] : memref<1x128xf32, #tpu.memory_space<vmem>>, vector<1x128xf32>
    %37 = vector.broadcast %36 : vector<1x128xf32> to vector<16x128xf32>
    %38 = arith.addf %35, %37 : vector<16x128xf32>
    %cst_26 = arith.constant 0.000000e+00 : f32
    %39 = vector.broadcast %cst_26 : f32 to vector<16x128xf32>
    %40 = arith.cmpf ogt, %38, %39 : vector<16x128xf32>
    %cst_27 = arith.constant 2.000000e-01 : f32
    %41 = vector.broadcast %cst_27 : f32 to vector<16x128xf32>
    %42 = arith.mulf %41, %38 : vector<16x128xf32>
    %43 = arith.select %40, %38, %42 : vector<16x128xi1>, vector<16x128xf32>
    %44 = arith.truncf %43 : vector<16x128xf32> to vector<16x128xbf16>
    %c0_28 = arith.constant 0 : index
    %c0_29 = arith.constant 0 : index
    %45 = vector.load %arg10[%c0_28, %c0_29] : memref<128x128xbf16, #tpu.memory_space<vmem>>, vector<128x128xbf16>
    %cst_30 = arith.constant dense<0.000000e+00> : vector<16x128xf32>
    %46 = tpu.matmul %44, %45, %cst_30 {dimension_numbers = #tpu.dot_dimension_numbers<[1], [0], [0], [1], [0, 0, 1, 1], [], []>} : vector<16x128xbf16>, vector<128x128xbf16>, vector<16x128xf32> -> vector<16x128xf32>
    %c0_31 = arith.constant 0 : index
    %c0_32 = arith.constant 0 : index
    %47 = vector.load %arg11[%c0_31, %c0_32] : memref<1x128xf32, #tpu.memory_space<vmem>>, vector<1x128xf32>
    %48 = vector.broadcast %47 : vector<1x128xf32> to vector<16x128xf32>
    %49 = arith.addf %46, %48 : vector<16x128xf32>
    %50 = arith.truncf %49 : vector<16x128xf32> to vector<16x128xbf16>
    %c0_33 = arith.constant 0 : index
    %c0_34 = arith.constant 0 : index
    %51 = vector.load %arg12[%c0_33, %c0_34] : memref<16x128xbf16, #tpu.memory_space<vmem>>, vector<16x128xbf16>
    tpu.vector_store %arg12[%c0_33, %c0_34], %50 {strides = array<i32>} : memref<16x128xbf16, #tpu.memory_space<vmem>>, vector<16x128xbf16>,
    return
  }
  func.func @transform_0(%arg0: i32) -> (i32, i32) {
    %c0_i32 = arith.constant 0 : i32
    %c0_i32_0 = arith.constant 0 : i32
    return %arg0, %c0_i32 : i32, i32
  }
  func.func @transform_1(%arg0: i32) -> (i32, i32) {
    %c0_i32 = arith.constant 0 : i32
    %c0_i32_0 = arith.constant 0 : i32
    %c0_i32_1 = arith.constant 0 : i32
    return %c0_i32, %c0_i32_0 : i32, i32
  }
  func.func @transform_2(%arg0: i32) -> (i32, i32) {
    %c0_i32 = arith.constant 0 : i32
    %c0_i32_0 = arith.constant 0 : i32
    %c0_i32_1 = arith.constant 0 : i32
    return %c0_i32, %c0_i32_0 : i32, i32
  }
  func.func @transform_3(%arg0: i32) -> (i32, i32) {
    %c0_i32 = arith.constant 0 : i32
    %c0_i32_0 = arith.constant 0 : i32
    %c0_i32_1 = arith.constant 0 : i32
    return %c0_i32, %c0_i32_0 : i32, i32
  }
  func.func @transform_4(%arg0: i32) -> (i32, i32) {
    %c0_i32 = arith.constant 0 : i32
    %c0_i32_0 = arith.constant 0 : i32
    %c0_i32_1 = arith.constant 0 : i32
    return %c0_i32, %c0_i32_0 : i32, i32
  }
  func.func @transform_5(%arg0: i32) -> (i32, i32) {
    %c0_i32 = arith.constant 0 : i32
    %c0_i32_0 = arith.constant 0 : i32
    %c0_i32_1 = arith.constant 0 : i32
    return %c0_i32, %c0_i32_0 : i32, i32
  }
  func.func @transform_6(%arg0: i32) -> (i32, i32) {
    %c0_i32 = arith.constant 0 : i32
    %c0_i32_0 = arith.constant 0 : i32
    %c0_i32_1 = arith.constant 0 : i32
    return %c0_i32, %c0_i32_0 : i32, i32
  }
  func.func @transform_7(%arg0: i32) -> (i32, i32) {
    %c0_i32 = arith.constant 0 : i32
    %c0_i32_0 = arith.constant 0 : i32
    %c0_i32_1 = arith.constant 0 : i32
    return %c0_i32, %c0_i32_0 : i32, i32
  }
  func.func @transform_8(%arg0: i32) -> (i32, i32) {
    %c0_i32 = arith.constant 0 : i32
    %c0_i32_0 = arith.constant 0 : i32
    %c0_i32_1 = arith.constant 0 : i32
    return %c0_i32, %c0_i32_0 : i32, i32
  }
  func.func @transform_9(%arg0: i32) -> (i32, i32) {
    %c0_i32 = arith.constant 0 : i32
    %c0_i32_0 = arith.constant 0 : i32
    %c0_i32_1 = arith.constant 0 : i32
    return %c0_i32, %c0_i32_0 : i32, i32
  }
  func.func @transform_10(%arg0: i32) -> (i32, i32) {
    %c0_i32 = arith.constant 0 : i32
    %c0_i32_0 = arith.constant 0 : i32
    %c0_i32_1 = arith.constant 0 : i32
    return %c0_i32, %c0_i32_0 : i32, i32
  }
  func.func @transform_11(%arg0: i32) -> (i32, i32) {
    %c0_i32 = arith.constant 0 : i32
    %c0_i32_0 = arith.constant 0 : i32
    return %arg0, %c0_i32 : i32, i32
  }
}

</mosaic_0001>

<llo_original>
// kernel: tpu_custom_call.1
$region0: #{tpu_custom_call.1}
  #allocation0 [shape = 'u32[]', space=smem, size = 0x4, offset = 0x4, fixed_abs, tag = 'smem constant byte address 0x4 - core index']
  #allocation1 [shape = 'u32[144,128]{1,0:T(1,128)}', space=vmem, size = 0x12000, scoped, tag = 'internal scratch']
  %s0 = inlined_call_operand.hbm [shape: bf16[16,128], index: 0, kind: input, shape index: {}]
  %s1 = inlined_call_operand.hbm [shape: bf16[128,128], index: 1, kind: input, shape index: {}]
  %s2 = inlined_call_operand.vmem [shape: f32[1,128], index: 2, kind: input, shape index: {}]
  %s3 = inlined_call_operand.hbm [shape: bf16[128,128], index: 3, kind: input, shape index: {}]
  %s4 = inlined_call_operand.vmem [shape: f32[1,128], index: 4, kind: input, shape index: {}]
  %s5 = inlined_call_operand.hbm [shape: bf16[128,128], index: 5, kind: input, shape index: {}]
  %s6 = inlined_call_operand.vmem [shape: f32[1,128], index: 6, kind: input, shape index: {}]
  %s7 = inlined_call_operand.hbm [shape: bf16[128,128], index: 7, kind: input, shape index: {}]
  %s8 = inlined_call_operand.vmem [shape: f32[1,128], index: 8, kind: input, shape index: {}]
  %s9 = inlined_call_operand.hbm [shape: bf16[128,128], index: 9, kind: input, shape index: {}]
  %s10 = inlined_call_operand.vmem [shape: f32[1,128], index: 10, kind: input, shape index: {}]
  %s11 = inlined_call_operand.hbm [shape: bf16[16,128], index: 11, kind: output, shape index: {}]
  %s12 = sld [smem:[#allocation0]]
  $region78: #{tpu_custom_call.1} parent=0
    _
  %s14 = ssub.s32 1, %s12
  %s15 = scalar_select 0, %s14, %s12
  $region1: #{tpu_custom_call.1} parent=0
    #allocation2 [shape = 'u8[4096]{0}', space=vmem, size = 0x1000, scoped, tag = 'input window, operand 0, single buffered']
    #allocation3 [shape = 's32[1]{0}', space=sflag, size = 0x4, scoped, tag = 'scoped memory for tpu_custom_call.1']
    #allocation4 [shape = 's32[1]{0}', space=sflag, size = 0x4, scoped, tag = 'scoped memory for tpu_custom_call.1']
    #allocation5 [shape = 'u8[32768]{0}', space=vmem, size = 0x8000, scoped, tag = 'input window, operand 1, single buffered']
    #allocation6 [shape = 's32[1]{0}', space=sflag, size = 0x4, scoped, tag = 'scoped memory for tpu_custom_call.1']
    #allocation7 [shape = 'u8[32768]{0}', space=vmem, size = 0x8000, scoped, tag = 'input window, operand 3, single buffered']
    #allocation8 [shape = 'u8[32768]{0}', space=vmem, size = 0x8000, scoped, tag = 'input window, operand 5, single buffered']
    #allocation9 [shape = 's32[1]{0}', space=sflag, size = 0x4, scoped, tag = 'scoped memory for tpu_custom_call.1']
    #allocation10 [shape = 'u8[32768]{0}', space=vmem, size = 0x8000, scoped, tag = 'input window, operand 7, single buffered']
    #allocation11 [shape = 'u8[32768]{0}', space=vmem, size = 0x8000, scoped, tag = 'input window, operand 9, single buffered']
    #allocation12 [shape = 's32[1]{0}', space=sflag, size = 0x4, scoped, tag = 'scoped memory for tpu_custom_call.1']
    #allocation13 [shape = 'u8[4096]{0}', space=vmem, size = 0x1000, scoped, tag = 'output window, operand 0, single buffered']
    %16 = vsyncpa [#allocation3], 0
    %17 = vsyncpa [#allocation6], 0
    %18 = vsyncpa [#allocation9], 0
    %19 = vsyncpa [#allocation12], 0
    %20 = vsyncpa [#allocation4], 0
    // Predicated region
    $region2: #{tpu_custom_call.1} parent=1 // pred_check
      _
    $region3: #{tpu_custom_call.1} parent=1 // pred_check_branch
      %22 = sbr.rel (0) target = $region5
    $region4: #{tpu_custom_call.1} parent=1 // pred_region
      %s24 = ssub.s32 128, 128
      %25 = vsyncadd [#allocation3], %s24
      %s26 = sshll.u32 [#allocation2], 4
      %s27 = int_to_ptr.vmem [resolvable:$true] %s26
      %32 = dma.hbm_to_vmem [thread:$0]  %s0, 128, %s27, [#allocation3], 64, 64, 4
    $region5: #{tpu_custom_call.1} parent=1 // pred_fallthru
      _
    // Predicated region
    $region6: #{tpu_custom_call.1} parent=1 // pred_check
      _
    $region7: #{tpu_custom_call.1} parent=1 // pred_check_branch
      %34 = sbr.rel (0) target = $region9
    $region8: #{tpu_custom_call.1} parent=1 // pred_region
      %s36 = ssub.s32 1024, 1024
      %37 = vsyncadd [#allocation6], %s36
      %s38 = sshll.u32 [#allocation5], 4
      %s39 = int_to_ptr.vmem [resolvable:$true] %s38
      %44 = dma.hbm_to_vmem [thread:$0]  %s1, 1024, %s39, [#allocation6], 64, 64, 4
    $region9: #{tpu_custom_call.1} parent=1 // pred_fallthru
      _
    // Predicated region
    $region10: #{tpu_custom_call.1} parent=1 // pred_check
      _
    $region11: #{tpu_custom_call.1} parent=1 // pred_check_branch
      %46 = sbr.rel (0) target = $region13
    $region12: #{tpu_custom_call.1} parent=1 // pred_region
      _
    $region13: #{tpu_custom_call.1} parent=1 // pred_fallthru
      _
    // Predicated region
    $region14: #{tpu_custom_call.1} parent=1 // pred_check
      _
    $region15: #{tpu_custom_call.1} parent=1 // pred_check_branch
      %48 = sbr.rel (0) target = $region17
    $region16: #{tpu_custom_call.1} parent=1 // pred_region
      %s50 = ssub.s32 1024, 1024
      %51 = vsyncadd [#allocation6], %s50
      %s52 = sshll.u32 [#allocation7], 4
      %s53 = int_to_ptr.vmem [resolvable:$true] %s52
      %58 = dma.hbm_to_vmem [thread:$0]  %s3, 1024, %s53, [#allocation6], 64, 64, 4
    $region17: #{tpu_custom_call.1} parent=1 // pred_fallthru
      _
    // Predicated region
    $region18: #{tpu_custom_call.1} parent=1 // pred_check
      _
    $region19: #{tpu_custom_call.1} parent=1 // pred_check_branch
      %60 = sbr.rel (0) target = $region21
    $region20: #{tpu_custom_call.1} parent=1 // pred_region
      _
    $region21: #{tpu_custom_call.1} parent=1 // pred_fallthru
      _
    // Predicated region
    $region22: #{tpu_custom_call.1} parent=1 // pred_check
      _
    $region23: #{tpu_custom_call.1} parent=1 // pred_check_branch
      %62 = sbr.rel (0) target = $region25
    $region24: #{tpu_custom_call.1} parent=1 // pred_region
      %s64 = ssub.s32 1024, 1024
      %65 = vsyncadd [#allocation9], %s64
      %s66 = sshll.u32 [#allocation8], 4
      %s67 = int_to_ptr.vmem [resolvable:$true] %s66
      %72 = dma.hbm_to_vmem [thread:$0]  %s5, 1024, %s67, [#allocation9], 64, 64, 4
    $region25: #{tpu_custom_call.1} parent=1 // pred_fallthru
      _
    // Predicated region
    $region26: #{tpu_custom_call.1} parent=1 // pred_check
      _
    $region27: #{tpu_custom_call.1} parent=1 // pred_check_branch
      %74 = sbr.rel (0) target = $region29
    $region28: #{tpu_custom_call.1} parent=1 // pred_region
      _
    $region29: #{tpu_custom_call.1} parent=1 // pred_fallthru
      _
    // Predicated region
    $region30: #{tpu_custom_call.1} parent=1 // pred_check
      _
    $region31: #{tpu_custom_call.1} parent=1 // pred_check_branch
      %76 = sbr.rel (0) target = $region33
    $region32: #{tpu_custom_call.1} parent=1 // pred_region
      %s78 = ssub.s32 1024, 1024
      %79 = vsyncadd [#allocation9], %s78
      %s80 = sshll.u32 [#allocation10], 4
      %s81 = int_to_ptr.vmem [resolvable:$true] %s80
      %86 = dma.hbm_to_vmem [thread:$0]  %s7, 1024, %s81, [#allocation9], 64, 64, 4
    $region33: #{tpu_custom_call.1} parent=1 // pred_fallthru
      _
    // Predicated region
    $region34: #{tpu_custom_call.1} parent=1 // pred_check
      _
    $region35: #{tpu_custom_call.1} parent=1 // pred_check_branch
      %88 = sbr.rel (0) target = $region37
    $region36: #{tpu_custom_call.1} parent=1 // pred_region
      _
    $region37: #{tpu_custom_call.1} parent=1 // pred_fallthru
      _
    // Predicated region
    $region38: #{tpu_custom_call.1} parent=1 // pred_check
      _
    $region39: #{tpu_custom_call.1} parent=1 // pred_check_branch
      %90 = sbr.rel (0) target = $region41
    $region40: #{tpu_custom_call.1} parent=1 // pred_region
      %s92 = ssub.s32 1024, 1024
      %93 = vsyncadd [#allocation12], %s92
      %s94 = sshll.u32 [#allocation11], 4
      %s95 = int_to_ptr.vmem [resolvable:$true] %s94
      %100 = dma.hbm_to_vmem [thread:$0]  %s9, 1024, %s95, [#allocation12], 64, 64, 4
    $region41: #{tpu_custom_call.1} parent=1 // pred_fallthru
      _
    // Predicated region
    $region42: #{tpu_custom_call.1} parent=1 // pred_check
      _
    $region43: #{tpu_custom_call.1} parent=1 // pred_check_branch
      %102 = sbr.rel (0) target = $region45
    $region44: #{tpu_custom_call.1} parent=1 // pred_region
      _
    $region45: #{tpu_custom_call.1} parent=1 // pred_fallthru
      _
    // Predicated region
    $region46: #{tpu_custom_call.1} parent=1 // pred_check
      _
    $region47: #{tpu_custom_call.1} parent=1 // pred_check_branch
      %104 = sbr.rel (0) target = $region49
    $region48: #{tpu_custom_call.1} parent=1 // pred_region
      %105 = dma.done [#allocation3], 128
    $region49: #{tpu_custom_call.1} parent=1 // pred_fallthru
      _
    // Predicated region
    $region50: #{tpu_custom_call.1} parent=1 // pred_check
      _
    $region51: #{tpu_custom_call.1} parent=1 // pred_check_branch
      %107 = sbr.rel (0) target = $region53
    $region52: #{tpu_custom_call.1} parent=1 // pred_region
      %108 = dma.done [#allocation6], 1024
    $region53: #{tpu_custom_call.1} parent=1 // pred_fallthru
      _
    // Predicated region
    $region54: #{tpu_custom_call.1} parent=1 // pred_check
      _
    $region55: #{tpu_custom_call.1} parent=1 // pred_check_branch
      %110 = sbr.rel (0) target = $region57
    $region56: #{tpu_custom_call.1} parent=1 // pred_region
      %111 = dma.done [#allocation6], 1024
    $region57: #{tpu_custom_call.1} parent=1 // pred_fallthru
      _
    // Predicated region
    $region58: #{tpu_custom_call.1} parent=1 // pred_check
      _
    $region59: #{tpu_custom_call.1} parent=1 // pred_check_branch
      %113 = sbr.rel (0) target = $region61
    $region60: #{tpu_custom_call.1} parent=1 // pred_region
      %114 = dma.done [#allocation9], 1024
    $region61: #{tpu_custom_call.1} parent=1 // pred_fallthru
      _
    // Predicated region
    $region62: #{tpu_custom_call.1} parent=1 // pred_check
      _
    $region63: #{tpu_custom_call.1} parent=1 // pred_check_branch
      %116 = sbr.rel (0) target = $region65
    $region64: #{tpu_custom_call.1} parent=1 // pred_region
      %117 = dma.done [#allocation9], 1024
    $region65: #{tpu_custom_call.1} parent=1 // pred_fallthru
      _
    // Predicated region
    $region66: #{tpu_custom_call.1} parent=1 // pred_check
      _
    $region67: #{tpu_custom_call.1} parent=1 // pred_check_branch
      %119 = sbr.rel (0) target = $region69
    $region68: #{tpu_custom_call.1} parent=1 // pred_region
      %120 = dma.done [#allocation12], 1024
    $region69: #{tpu_custom_call.1} parent=1 // pred_fallthru
      _
    %v122 = vld [vmem:[#allocation2] sm:$0xf]
    %v123 = vld [vmem:[#allocation2 + $0x4] sm:$0xf]
    %v124 = vld [vmem:[#allocation5] sm:$0xf]
    %v125 = vld [vmem:[#allocation5 + $0x4] sm:$0xf]
    %v126 = vld [vmem:[#allocation5 + $0x8] sm:$0xf]
    %v127 = vld [vmem:[#allocation5 + $0xc] sm:$0xf]
    %v128 = vld [vmem:[#allocation5 + $0x10] sm:$0xf]
    %v129 = vld [vmem:[#allocation5 + $0x14] sm:$0xf]
    %v130 = vld [vmem:[#allocation5 + $0x18] sm:$0xf]
    %v131 = vld [vmem:[#allocation5 + $0x1c] sm:$0xf]
    %v132 = vld [vmem:[#allocation5 + $0x20] sm:$0xf]
    %v133 = vld [vmem:[#allocation5 + $0x24] sm:$0xf]
    %v134 = vld [vmem:[#allocation5 + $0x28] sm:$0xf]
    %v135 = vld [vmem:[#allocation5 + $0x2c] sm:$0xf]
    %v136 = vld [vmem:[#allocation5 + $0x30] sm:$0xf]
    %v137 = vld [vmem:[#allocation5 + $0x34] sm:$0xf]
    %v138 = vld [vmem:[#allocation5 + $0x38] sm:$0xf]
    %v139 = vld [vmem:[#allocation5 + $0x3c] sm:$0xf]
    %v140 = vld [vmem:[%s2] sm:$0x1]
    %v142 = vlaneseq
    %v143 = vshrl.u32 %v142, 7
    %v144 = vsub.s32 0, %v143
    %v145 = vrot.slane %v140, %v144
    %v149 = vunpack.c.l.b16 %v122
    %v150 = vunpack.c.l.b16 %v123
    %v151 = vpack.c.b16 %v150, %v149
    %v169 = vunpack.c.l.b16 %v124
    %v170 = vunpack.c.l.b16 %v125
    %v171 = vunpack.c.l.b16 %v126
    %v172 = vunpack.c.l.b16 %v127
    %v173 = vunpack.c.l.b16 %v128
    %v174 = vunpack.c.l.b16 %v129
    %v175 = vunpack.c.l.b16 %v130
    %v176 = vunpack.c.l.b16 %v131
    %v177 = vunpack.c.l.b16 %v132
    %v178 = vunpack.c.l.b16 %v133
    %v179 = vunpack.c.l.b16 %v134
    %v180 = vunpack.c.l.b16 %v135
    %v181 = vunpack.c.l.b16 %v136
    %v182 = vunpack.c.l.b16 %v137
    %v183 = vunpack.c.l.b16 %v138
    %v184 = vunpack.c.l.b16 %v139
    %v185 = vpack.c.b16 %v170, %v169
    %v186 = vpack.c.b16 %v172, %v171
    %v187 = vpack.c.b16 %v174, %v173
    %v188 = vpack.c.b16 %v176, %v175
    %v189 = vpack.c.b16 %v178, %v177
    %v190 = vpack.c.b16 %v180, %v179
    %v191 = vpack.c.b16 %v182, %v181
    %v192 = vpack.c.b16 %v184, %v183
    %201 = vmatprep.subr.bf16.mxu0 0
    %202 = vmatpush1.bf16.msra.mxu0 %v192
    %203 = vmatprep.subr.bf16.mxu0 0
    %204 = vmatpush1.bf16.msra.mxu0 %v191
    %205 = vmatprep.subr.bf16.mxu0 0
    %206 = vmatpush1.bf16.msra.mxu0 %v190
    %207 = vmatprep.subr.bf16.mxu0 0
    %208 = vmatpush1.bf16.msra.mxu0 %v189
    %209 = vmatprep.subr.bf16.mxu0 0
    %210 = vmatpush1.bf16.msra.mxu0 %v188
    %211 = vmatprep.subr.bf16.mxu0 0
    %212 = vmatpush1.bf16.msra.mxu0 %v187
    %213 = vmatprep.subr.bf16.mxu0 0
    %214 = vmatpush1.bf16.msra.mxu0 %v186
    %215 = vmatprep.subr.bf16.mxu0 0
    %216 = vmatpush1.bf16.msra.mxu0 %v185
    %217 = vmatprep.subr.bf16.mxu0 0
    %218 = vmatpush2.bf16.msra.mxu0 0
    %219 = vmatprep.subr.bf16.mxu0 0
    %220 = vmatpush2.bf16.msra.mxu0 0
    %221 = vmatprep.subr.bf16.mxu0 0
    %222 = vmatpush2.bf16.msra.mxu0 0
    %223 = vmatprep.subr.bf16.mxu0 0
    %224 = vmatpush2.bf16.msra.mxu0 0
    %225 = vmatprep.subr.bf16.mxu0 0
    %226 = vmatpush2.bf16.msra.mxu0 0
    %227 = vmatprep.subr.bf16.mxu0 0
    %228 = vmatpush2.bf16.msra.mxu0 0
    %229 = vmatprep.subr.bf16.mxu0 0
    %230 = vmatpush2.bf16.msra.mxu0 0
    %231 = vmatprep.subr.bf16.mxu0 0
    %232 = vmatpush2.bf16.msra.mxu0 0
    %233 = vmatprep.mubr.bf16.mxu0 0
    %234 = vmatmul.mubr.bf16.gmra.mxu0 %v151
    %v235 = vpop.f32.mrf.mxu0
    %v236 = vadd.f32 %v145, %v235
    %v237 = vpop.f32.mrf.mxu0
    %v238 = vpop.f32.mrf.mxu0
    %v239 = vadd.f32 %v145, %v238
    %v240 = vpop.f32.mrf.mxu0
    %241 = vdwg.mxu0
    %vm242 = vcmp.gt.f32.partialorder %v236, 0.0
    %vm243 = vcmp.gt.f32.partialorder %v239, 0.0
    %v244 = vmul.f32 %v236, 0.2
    %v245 = vmul.f32 %v239, 0.2
    %v246 = vsel %vm242, %v236, %v244
    %v247 = vsel %vm243, %v239, %v245
    %v248 = vpack.c.bf16 %v247, %v246
    %v249 = vld [vmem:[#allocation7] sm:$0xf]
    %v250 = vld [vmem:[#allocation7 + $0x4] sm:$0xf]
    %v251 = vld [vmem:[#allocation7 + $0x8] sm:$0xf]
    %v252 = vld [vmem:[#allocation7 + $0xc] sm:$0xf]
    %v253 = vld [vmem:[#allocation7 + $0x10] sm:$0xf]
    %v254 = vld [vmem:[#allocation7 + $0x14] sm:$0xf]
    %v255 = vld [vmem:[#allocation7 + $0x18] sm:$0xf]
    %v256 = vld [vmem:[#allocation7 + $0x1c] sm:$0xf]
    %v257 = vld [vmem:[#allocation7 + $0x20] sm:$0xf]
    %v258 = vld [vmem:[#allocation7 + $0x24] sm:$0xf]
    %v259 = vld [vmem:[#allocation7 + $0x28] sm:$0xf]
    %v260 = vld [vmem:[#allocation7 + $0x2c] sm:$0xf]
    %v261 = vld [vmem:[#allocation7 + $0x30] sm:$0xf]
    %v262 = vld [vmem:[#allocation7 + $0x34] sm:$0xf]
    %v263 = vld [vmem:[#allocation7 + $0x38] sm:$0xf]
    %v264 = vld [vmem:[#allocation7 + $0x3c] sm:$0xf]
    %v265 = vld [vmem:[%s4] sm:$0x1]
    %v267 = vlaneseq
    %v268 = vshrl.u32 %v267, 7
    %v269 = vsub.s32 0, %v268
    %v270 = vrot.slane %v265, %v269
    %v288 = vunpack.c.l.b16 %v249
    %v289 = vunpack.c.l.b16 %v250
    %v290 = vunpack.c.l.b16 %v251
    %v291 = vunpack.c.l.b16 %v252
    %v292 = vunpack.c.l.b16 %v253
    %v293 = vunpack.c.l.b16 %v254
    %v294 = vunpack.c.l.b16 %v255
    %v295 = vunpack.c.l.b16 %v256
    %v296 = vunpack.c.l.b16 %v257
    %v297 = vunpack.c.l.b16 %v258
    %v298 = vunpack.c.l.b16 %v259
    %v299 = vunpack.c.l.b16 %v260
    %v300 = vunpack.c.l.b16 %v261
    %v301 = vunpack.c.l.b16 %v262
    %v302 = vunpack.c.l.b16 %v263
    %v303 = vunpack.c.l.b16 %v264
    %v304 = vpack.c.b16 %v289, %v288
    %v305 = vpack.c.b16 %v291, %v290
    %v306 = vpack.c.b16 %v293, %v292
    %v307 = vpack.c.b16 %v295, %v294
    %v308 = vpack.c.b16 %v297, %v296
    %v309 = vpack.c.b16 %v299, %v298
    %v310 = vpack.c.b16 %v301, %v300
    %v311 = vpack.c.b16 %v303, %v302
    %320 = vmatprep.subr.bf16.mxu0 0
    %321 = vmatpush1.bf16.msra.mxu0 %v311
    %322 = vmatprep.subr.bf16.mxu0 0
    %323 = vmatpush1.bf16.msra.mxu0 %v310
    %324 = vmatprep.subr.bf16.mxu0 0
    %325 = vmatpush1.bf16.msra.mxu0 %v309
    %326 = vmatprep.subr.bf16.mxu0 0
    %327 = vmatpush1.bf16.msra.mxu0 %v308
    %328 = vmatprep.subr.bf16.mxu0 0
    %329 = vmatpush1.bf16.msra.mxu0 %v307
    %330 = vmatprep.subr.bf16.mxu0 0
    %331 = vmatpush1.bf16.msra.mxu0 %v306
    %332 = vmatprep.subr.bf16.mxu0 0
    %333 = vmatpush1.bf16.msra.mxu0 %v305
    %334 = vmatprep.subr.bf16.mxu0 0
    %335 = vmatpush1.bf16.msra.mxu0 %v304
    %336 = vmatprep.subr.bf16.mxu0 0
    %337 = vmatpush2.bf16.msra.mxu0 0
    %338 = vmatprep.subr.bf16.mxu0 0
    %339 = vmatpush2.bf16.msra.mxu0 0
    %340 = vmatprep.subr.bf16.mxu0 0
    %341 = vmatpush2.bf16.msra.mxu0 0
    %342 = vmatprep.subr.bf16.mxu0 0
    %343 = vmatpush2.bf16.msra.mxu0 0
    %344 = vmatprep.subr.bf16.mxu0 0
    %345 = vmatpush2.bf16.msra.mxu0 0
    %346 = vmatprep.subr.bf16.mxu0 0
    %347 = vmatpush2.bf16.msra.mxu0 0
    %348 = vmatprep.subr.bf16.mxu0 0
    %349 = vmatpush2.bf16.msra.mxu0 0
    %350 = vmatprep.subr.bf16.mxu0 0
    %351 = vmatpush2.bf16.msra.mxu0 0
    %352 = vmatprep.mubr.bf16.mxu0 0
    %353 = vmatmul.mubr.bf16.gmra.mxu0 %v248
    %v354 = vpop.f32.mrf.mxu0
    %v355 = vadd.f32 %v270, %v354
    %v356 = vpop.f32.mrf.mxu0
    %v357 = vpop.f32.mrf.mxu0
    %v358 = vadd.f32 %v270, %v357
    %v359 = vpop.f32.mrf.mxu0
    %360 = vdwg.mxu0
    %vm361 = vcmp.gt.f32.partialorder %v355, 0.0
    %vm362 = vcmp.gt.f32.partialorder %v358, 0.0
    %v363 = vmul.f32 %v355, 0.2
    %v364 = vmul.f32 %v358, 0.2
    %v365 = vsel %vm361, %v355, %v363
    %v366 = vsel %vm362, %v358, %v364
    %v367 = vpack.c.bf16 %v366, %v365
    %v368 = vld [vmem:[#allocation8] sm:$0xf]
    %v369 = vld [vmem:[#allocation8 + $0x4] sm:$0xf]
    %v370 = vld [vmem:[#allocation8 + $0x8] sm:$0xf]
    %v371 = vld [vmem:[#allocation8 + $0xc] sm:$0xf]
    %v372 = vld [vmem:[#allocation8 + $0x10] sm:$0xf]
    %v373 = vld [vmem:[#allocation8 + $0x14] sm:$0xf]
    %v374 = vld [vmem:[#allocation8 + $0x18] sm:$0xf]
    %v375 = vld [vmem:[#allocation8 + $0x1c] sm:$0xf]
    %v376 = vld [vmem:[#allocation8 + $0x20] sm:$0xf]
    %v377 = vld [vmem:[#allocation8 + $0x24] sm:$0xf]
    %v378 = vld [vmem:[#allocation8 + $0x28] sm:$0xf]
    %v379 = vld [vmem:[#allocation8 + $0x2c] sm:$0xf]
    %v380 = vld [vmem:[#allocation8 + $0x30] sm:$0xf]
    %v381 = vld [vmem:[#allocation8 + $0x34] sm:$0xf]
    %v382 = vld [vmem:[#allocation8 + $0x38] sm:$0xf]
    %v383 = vld [vmem:[#allocation8 + $0x3c] sm:$0xf]
    %v384 = vld [vmem:[%s6] sm:$0x1]
    %v386 = vlaneseq
    %v387 = vshrl.u32 %v386, 7
    %v388 = vsub.s32 0, %v387
    %v389 = vrot.slane %v384, %v388
    %v407 = vunpack.c.l.b16 %v368
    %v408 = vunpack.c.l.b16 %v369
    %v409 = vunpack.c.l.b16 %v370
    %v410 = vunpack.c.l.b16 %v371
    %v411 = vunpack.c.l.b16 %v372
    %v412 = vunpack.c.l.b16 %v373
    %v413 = vunpack.c.l.b16 %v374
    %v414 = vunpack.c.l.b16 %v375
    %v415 = vunpack.c.l.b16 %v376
    %v416 = vunpack.c.l.b16 %v377
    %v417 = vunpack.c.l.b16 %v378
    %v418 = vunpack.c.l.b16 %v379
    %v419 = vunpack.c.l.b16 %v380
    %v420 = vunpack.c.l.b16 %v381
    %v421 = vunpack.c.l.b16 %v382
    %v422 = vunpack.c.l.b16 %v383
    %v423 = vpack.c.b16 %v408, %v407
    %v424 = vpack.c.b16 %v410, %v409
    %v425 = vpack.c.b16 %v412, %v411
    %v426 = vpack.c.b16 %v414, %v413
    %v427 = vpack.c.b16 %v416, %v415
    %v428 = vpack.c.b16 %v418, %v417
    %v429 = vpack.c.b16 %v420, %v419
    %v430 = vpack.c.b16 %v422, %v421
    %439 = vmatprep.subr.bf16.mxu0 0
    %440 = vmatpush1.bf16.msra.mxu0 %v430
    %441 = vmatprep.subr.bf16.mxu0 0
    %442 = vmatpush1.bf16.msra.mxu0 %v429
    %443 = vmatprep.subr.bf16.mxu0 0
    %444 = vmatpush1.bf16.msra.mxu0 %v428
    %445 = vmatprep.subr.bf16.mxu0 0
    %446 = vmatpush1.bf16.msra.mxu0 %v427
    %447 = vmatprep.subr.bf16.mxu0 0
    %448 = vmatpush1.bf16.msra.mxu0 %v426
    %449 = vmatprep.subr.bf16.mxu0 0
    %450 = vmatpush1.bf16.msra.mxu0 %v425
    %451 = vmatprep.subr.bf16.mxu0 0
    %452 = vmatpush1.bf16.msra.mxu0 %v424
    %453 = vmatprep.subr.bf16.mxu0 0
    %454 = vmatpush1.bf16.msra.mxu0 %v423
    %455 = vmatprep.subr.bf16.mxu0 0
    %456 = vmatpush2.bf16.msra.mxu0 0
    %457 = vmatprep.subr.bf16.mxu0 0
    %458 = vmatpush2.bf16.msra.mxu0 0
    %459 = vmatprep.subr.bf16.mxu0 0
    %460 = vmatpush2.bf16.msra.mxu0 0
    %461 = vmatprep.subr.bf16.mxu0 0
    %462 = vmatpush2.bf16.msra.mxu0 0
    %463 = vmatprep.subr.bf16.mxu0 0
    %464 = vmatpush2.bf16.msra.mxu0 0
    %465 = vmatprep.subr.bf16.mxu0 0
    %466 = vmatpush2.bf16.msra.mxu0 0
    %467 = vmatprep.subr.bf16.mxu0 0
    %468 = vmatpush2.bf16.msra.mxu0 0
    %469 = vmatprep.subr.bf16.mxu0 0
    %470 = vmatpush2.bf16.msra.mxu0 0
    %471 = vmatprep.mubr.bf16.mxu0 0
    %472 = vmatmul.mubr.bf16.gmra.mxu0 %v367
    %v473 = vpop.f32.mrf.mxu0
    %v474 = vadd.f32 %v389, %v473
    %v475 = vpop.f32.mrf.mxu0
    %v476 = vpop.f32.mrf.mxu0
    %v477 = vadd.f32 %v389, %v476
    %v478 = vpop.f32.mrf.mxu0
    %479 = vdwg.mxu0
    %vm480 = vcmp.gt.f32.partialorder %v474, 0.0
    %vm481 = vcmp.gt.f32.partialorder %v477, 0.0
    %v482 = vmul.f32 %v474, 0.2
    %v483 = vmul.f32 %v477, 0.2
    %v484 = vsel %vm480, %v474, %v482
    %v485 = vsel %vm481, %v477, %v483
    %v486 = vpack.c.bf16 %v485, %v484
    %v487 = vld [vmem:[#allocation10] sm:$0xf]
    %v488 = vld [vmem:[#allocation10 + $0x4] sm:$0xf]
    %v489 = vld [vmem:[#allocation10 + $0x8] sm:$0xf]
    %v490 = vld [vmem:[#allocation10 + $0xc] sm:$0xf]
    %v491 = vld [vmem:[#allocation10 + $0x10] sm:$0xf]
    %v492 = vld [vmem:[#allocation10 + $0x14] sm:$0xf]
    %v493 = vld [vmem:[#allocation10 + $0x18] sm:$0xf]
    %v494 = vld [vmem:[#allocation10 + $0x1c] sm:$0xf]
    %v495 = vld [vmem:[#allocation10 + $0x20] sm:$0xf]
    %v496 = vld [vmem:[#allocation10 + $0x24] sm:$0xf]
    %v497 = vld [vmem:[#allocation10 + $0x28] sm:$0xf]
    %v498 = vld [vmem:[#allocation10 + $0x2c] sm:$0xf]
    %v499 = vld [vmem:[#allocation10 + $0x30] sm:$0xf]
    %v500 = vld [vmem:[#allocation10 + $0x34] sm:$0xf]
    %v501 = vld [vmem:[#allocation10 + $0x38] sm:$0xf]
    %v502 = vld [vmem:[#allocation10 + $0x3c] sm:$0xf]
    %v503 = vld [vmem:[%s8] sm:$0x1]
    %v505 = vlaneseq
    %v506 = vshrl.u32 %v505, 7
    %v507 = vsub.s32 0, %v506
    %v508 = vrot.slane %v503, %v507
    %v526 = vunpack.c.l.b16 %v487
    %v527 = vunpack.c.l.b16 %v488
    %v528 = vunpack.c.l.b16 %v489
    %v529 = vunpack.c.l.b16 %v490
    %v530 = vunpack.c.l.b16 %v491
    %v531 = vunpack.c.l.b16 %v492
    %v532 = vunpack.c.l.b16 %v493
    %v533 = vunpack.c.l.b16 %v494
    %v534 = vunpack.c.l.b16 %v495
    %v535 = vunpack.c.l.b16 %v496
    %v536 = vunpack.c.l.b16 %v497
    %v537 = vunpack.c.l.b16 %v498
    %v538 = vunpack.c.l.b16 %v499
    %v539 = vunpack.c.l.b16 %v500
    %v540 = vunpack.c.l.b16 %v501
    %v541 = vunpack.c.l.b16 %v502
    %v542 = vpack.c.b16 %v527, %v526
    %v543 = vpack.c.b16 %v529, %v528
    %v544 = vpack.c.b16 %v531, %v530
    %v545 = vpack.c.b16 %v533, %v532
    %v546 = vpack.c.b16 %v535, %v534
    %v547 = vpack.c.b16 %v537, %v536
    %v548 = vpack.c.b16 %v539, %v538
    %v549 = vpack.c.b16 %v541, %v540
    %558 = vmatprep.subr.bf16.mxu0 0
    %559 = vmatpush1.bf16.msra.mxu0 %v549
    %560 = vmatprep.subr.bf16.mxu0 0
    %561 = vmatpush1.bf16.msra.mxu0 %v548
    %562 = vmatprep.subr.bf16.mxu0 0
    %563 = vmatpush1.bf16.msra.mxu0 %v547
    %564 = vmatprep.subr.bf16.mxu0 0
    %565 = vmatpush1.bf16.msra.mxu0 %v546
    %566 = vmatprep.subr.bf16.mxu0 0
    %567 = vmatpush1.bf16.msra.mxu0 %v545
    %568 = vmatprep.subr.bf16.mxu0 0
    %569 = vmatpush1.bf16.msra.mxu0 %v544
    %570 = vmatprep.subr.bf16.mxu0 0
    %571 = vmatpush1.bf16.msra.mxu0 %v543
    %572 = vmatprep.subr.bf16.mxu0 0
    %573 = vmatpush1.bf16.msra.mxu0 %v542
    %574 = vmatprep.subr.bf16.mxu0 0
    %575 = vmatpush2.bf16.msra.mxu0 0
    %576 = vmatprep.subr.bf16.mxu0 0
    %577 = vmatpush2.bf16.msra.mxu0 0
    %578 = vmatprep.subr.bf16.mxu0 0
    %579 = vmatpush2.bf16.msra.mxu0 0
    %580 = vmatprep.subr.bf16.mxu0 0
    %581 = vmatpush2.bf16.msra.mxu0 0
    %582 = vmatprep.subr.bf16.mxu0 0
    %583 = vmatpush2.bf16.msra.mxu0 0
    %584 = vmatprep.subr.bf16.mxu0 0
    %585 = vmatpush2.bf16.msra.mxu0 0
    %586 = vmatprep.subr.bf16.mxu0 0
    %587 = vmatpush2.bf16.msra.mxu0 0
    %588 = vmatprep.subr.bf16.mxu0 0
    %589 = vmatpush2.bf16.msra.mxu0 0
    %590 = vmatprep.mubr.bf16.mxu0 0
    %591 = vmatmul.mubr.bf16.gmra.mxu0 %v486
    %v592 = vpop.f32.mrf.mxu0
    %v593 = vadd.f32 %v508, %v592
    %v594 = vpop.f32.mrf.mxu0
    %v595 = vpop.f32.mrf.mxu0
    %v596 = vadd.f32 %v508, %v595
    %v597 = vpop.f32.mrf.mxu0
    %598 = vdwg.mxu0
    %vm599 = vcmp.gt.f32.partialorder %v593, 0.0
    %vm600 = vcmp.gt.f32.partialorder %v596, 0.0
    %v601 = vmul.f32 %v593, 0.2
    %v602 = vmul.f32 %v596, 0.2
    %v603 = vsel %vm599, %v593, %v601
    %v604 = vsel %vm600, %v596, %v602
    %v605 = vpack.c.bf16 %v604, %v603
    %v606 = vld [vmem:[#allocation11] sm:$0xf]
    %v607 = vld [vmem:[#allocation11 + $0x4] sm:$0xf]
    %v608 = vld [vmem:[#allocation11 + $0x8] sm:$0xf]
    %v609 = vld [vmem:[#allocation11 + $0xc] sm:$0xf]
    %v610 = vld [vmem:[#allocation11 + $0x10] sm:$0xf]
    %v611 = vld [vmem:[#allocation11 + $0x14] sm:$0xf]
    %v612 = vld [vmem:[#allocation11 + $0x18] sm:$0xf]
    %v613 = vld [vmem:[#allocation11 + $0x1c] sm:$0xf]
    %v614 = vld [vmem:[#allocation11 + $0x20] sm:$0xf]
    %v615 = vld [vmem:[#allocation11 + $0x24] sm:$0xf]
    %v616 = vld [vmem:[#allocation11 + $0x28] sm:$0xf]
    %v617 = vld [vmem:[#allocation11 + $0x2c] sm:$0xf]
    %v618 = vld [vmem:[#allocation11 + $0x30] sm:$0xf]
    %v619 = vld [vmem:[#allocation11 + $0x34] sm:$0xf]
    %v620 = vld [vmem:[#allocation11 + $0x38] sm:$0xf]
    %v621 = vld [vmem:[#allocation11 + $0x3c] sm:$0xf]
    %v622 = vld [vmem:[%s10] sm:$0x1]
    %v624 = vlaneseq
    %v625 = vshrl.u32 %v624, 7
    %v626 = vsub.s32 0, %v625
    %v627 = vrot.slane %v622, %v626
    %v645 = vunpack.c.l.b16 %v606
    %v646 = vunpack.c.l.b16 %v607
    %v647 = vunpack.c.l.b16 %v608
    %v648 = vunpack.c.l.b16 %v609
    %v649 = vunpack.c.l.b16 %v610
    %v650 = vunpack.c.l.b16 %v611
    %v651 = vunpack.c.l.b16 %v612
    %v652 = vunpack.c.l.b16 %v613
    %v653 = vunpack.c.l.b16 %v614
    %v654 = vunpack.c.l.b16 %v615
    %v655 = vunpack.c.l.b16 %v616
    %v656 = vunpack.c.l.b16 %v617
    %v657 = vunpack.c.l.b16 %v618
    %v658 = vunpack.c.l.b16 %v619
    %v659 = vunpack.c.l.b16 %v620
    %v660 = vunpack.c.l.b16 %v621
    %v661 = vpack.c.b16 %v646, %v645
    %v662 = vpack.c.b16 %v648, %v647
    %v663 = vpack.c.b16 %v650, %v649
    %v664 = vpack.c.b16 %v652, %v651
    %v665 = vpack.c.b16 %v654, %v653
    %v666 = vpack.c.b16 %v656, %v655
    %v667 = vpack.c.b16 %v658, %v657
    %v668 = vpack.c.b16 %v660, %v659
    %677 = vmatprep.subr.bf16.mxu0 0
    %678 = vmatpush1.bf16.msra.mxu0 %v668
    %679 = vmatprep.subr.bf16.mxu0 0
    %680 = vmatpush1.bf16.msra.mxu0 %v667
    %681 = vmatprep.subr.bf16.mxu0 0
    %682 = vmatpush1.bf16.msra.mxu0 %v666
    %683 = vmatprep.subr.bf16.mxu0 0
    %684 = vmatpush1.bf16.msra.mxu0 %v665
    %685 = vmatprep.subr.bf16.mxu0 0
    %686 = vmatpush1.bf16.msra.mxu0 %v664
    %687 = vmatprep.subr.bf16.mxu0 0
    %688 = vmatpush1.bf16.msra.mxu0 %v663
    %689 = vmatprep.subr.bf16.mxu0 0
    %690 = vmatpush1.bf16.msra.mxu0 %v662
    %691 = vmatprep.subr.bf16.mxu0 0
    %692 = vmatpush1.bf16.msra.mxu0 %v661
    %693 = vmatprep.subr.bf16.mxu0 0
    %694 = vmatpush2.bf16.msra.mxu0 0
    %695 = vmatprep.subr.bf16.mxu0 0
    %696 = vmatpush2.bf16.msra.mxu0 0
    %697 = vmatprep.subr.bf16.mxu0 0
    %698 = vmatpush2.bf16.msra.mxu0 0
    %699 = vmatprep.subr.bf16.mxu0 0
    %700 = vmatpush2.bf16.msra.mxu0 0
    %701 = vmatprep.subr.bf16.mxu0 0
    %702 = vmatpush2.bf16.msra.mxu0 0
    %703 = vmatprep.subr.bf16.mxu0 0
    %704 = vmatpush2.bf16.msra.mxu0 0
    %705 = vmatprep.subr.bf16.mxu0 0
    %706 = vmatpush2.bf16.msra.mxu0 0
    %707 = vmatprep.subr.bf16.mxu0 0
    %708 = vmatpush2.bf16.msra.mxu0 0
    %709 = vmatprep.mubr.bf16.mxu0 0
    %710 = vmatmul.mubr.bf16.gmra.mxu0 %v605
    %v711 = vpop.f32.mrf.mxu0
    %v712 = vadd.f32 %v627, %v711
    %v713 = vpop.f32.mrf.mxu0
    %v714 = vpop.f32.mrf.mxu0
    %v715 = vadd.f32 %v627, %v714
    %v716 = vpop.f32.mrf.mxu0
    %717 = vdwg.mxu0
    %v718 = vpack.c.bf16 %v715, %v712
    %v720 = vunpack.c.l.b16 %v718
    %v721 = vunpack.c.h.b16 %v718
    %v722 = vpack.c.b16 %v720, %v720
    %v723 = vpack.c.b16 %v721, %v721
    %726 = vst [vmem:[#allocation13] sm:$0xf] %v722
    %727 = vst [vmem:[#allocation13 + $0x4] sm:$0xf] %v723
    // Predicated region
    $region70: #{tpu_custom_call.1} parent=1 // pred_check
      _
    $region71: #{tpu_custom_call.1} parent=1 // pred_check_branch
      %729 = sbr.rel (0) target = $region73
    $region72: #{tpu_custom_call.1} parent=1 // pred_region
      %s731 = ssub.s32 128, 128
      %732 = vsyncadd [#allocation4], %s731
      %s733 = sshll.u32 [#allocation13], 4
      %s734 = int_to_ptr.vmem [resolvable:$true] %s733
      %739 = dma.vmem_to_hbm [thread:$0]  %s734, 128, %s11, [#allocation4], 64, 64, 4
    $region73: #{tpu_custom_call.1} parent=1 // pred_fallthru
      _
    // Predicated region
    $region74: #{tpu_custom_call.1} parent=1 // pred_check
      _
    $region75: #{tpu_custom_call.1} parent=1 // pred_check_branch
      %741 = sbr.rel (0) target = $region77
    $region76: #{tpu_custom_call.1} parent=1 // pred_region
      %742 = dma.done [#allocation4], 128
    $region77: #{tpu_custom_call.1} parent=1 // pred_fallthru
      _
    %743 = vsyncpa [#allocation3], 1
    %744 = vsyncpa [#allocation6], 1
    %745 = vsyncpa [#allocation9], 1
    %746 = vsyncpa [#allocation12], 1
    %747 = vsyncpa [#allocation4], 1

</llo_original>
